<compile_context>
chip_gen: v7x
topology: tpu7x:2x2x1
jax: 0.10.0
libtpu: 0.0.40
codegen_flags: <defaults>
</compile_context>

<pallas_src>
import jax
import jax.numpy as jnp
from jax.experimental import pallas as pl
from jax.experimental.pallas import tpu as pltpu


TOTAL_CHARS = 27
EMB_SIZE = 10
CONTEXT = 32
NEURONS = 90
LANGS = 21

K_FUSED = CONTEXT * TOTAL_CHARS   # 864 (flattened one-shot contraction dim)
N_PAD = 128                        # lane-dense hidden / output width

HIGHEST = jax.lax.Precision.HIGHEST


def _round_up(x, m):
    return ((x + m - 1) // m) * m


# ---------------------------------------------------------------------------
# Kernel: one grid step processes a (tile_b, 864) slab of the flattened input.
#   h   = relu(x @ W_fused + b_fused)   -> (tile_b, 128)   MXU, K = 864
#   out = h @ W_cls + b_cls             -> (tile_b, 128)   MXU, K = 128
# ---------------------------------------------------------------------------
def langulator_kernel(x_ref, w1_ref, b1_ref, w2_ref, b2_ref, o_ref):
    # fused embedding + middle layer (bf16 operands, f32 accumulation)
    h = jnp.dot(x_ref[...], w1_ref[...], preferred_element_type=jnp.float32)
    h = jnp.maximum(h + b1_ref[...], 0.0)

    # classifier (padded to a full 128x128 MXU tile)
    out = jnp.dot(h.astype(jnp.bfloat16), w2_ref[...],
                  preferred_element_type=jnp.float32)
    o_ref[...] = out + b2_ref[...]


# ---------------------------------------------------------------------------
# Host-side weight fusion + lane padding.
# ---------------------------------------------------------------------------
def fuse_and_pad_params(params):
    """Returns f32 (W_fused_pad, b_fused_pad, W_cls_pad, b_cls_pad).

    Block p of W_fused is  W_emb @ W_mid[p*E:(p+1)*E, :], so that
      relu(x.reshape(B, 32*27) @ W_fused + b_fused)
    equals the original embedding->flatten->middle computation exactly.
    """
    w_emb, b_emb, w_mid, b_mid, w_cls, b_cls = params

    w_mid_r = w_mid.reshape(CONTEXT, EMB_SIZE, NEURONS)                # (32,10,90)
    w_fused = jnp.einsum('ce,pen->pcn', w_emb, w_mid_r,
                         precision=HIGHEST).reshape(K_FUSED, NEURONS)  # (864,90)
    b_fused = b_mid + jnp.einsum('e,pen->n', b_emb, w_mid_r,
                                 precision=HIGHEST)                    # (90,)

    w1 = jnp.zeros((K_FUSED, N_PAD), jnp.float32).at[:, :NEURONS].set(w_fused)
    b1 = jnp.zeros((1, N_PAD), jnp.float32).at[0, :NEURONS].set(b_fused)
    w2 = jnp.zeros((N_PAD, N_PAD), jnp.float32).at[:NEURONS, :LANGS].set(w_cls)
    b2 = jnp.zeros((1, N_PAD), jnp.float32).at[0, :LANGS].set(b_cls)
    return w1, b1, w2, b2


# ---------------------------------------------------------------------------
# Forward wrapper.
# ---------------------------------------------------------------------------
def langulator_forward(x, params, tile_b=1024):
    B = x.shape[0]
    w1f, b1, w2f, b2 = fuse_and_pad_params(params)
    w1 = w1f.astype(jnp.bfloat16)
    w2 = w2f.astype(jnp.bfloat16)

    # Flatten (contiguous view) + bf16 input to halve HBM traffic.
    x_flat = x.reshape(B, K_FUSED).astype(jnp.bfloat16)

    tb = min(tile_b, _round_up(B, 8))          # sublane-aligned batch tile
    b_pad = _round_up(B, tb)
    if b_pad != B:
        x_flat = jnp.pad(x_flat, ((0, b_pad - B), (0, 0)))
    n_tiles = b_pad // tb

    flops = 2 * b_pad * (K_FUSED * N_PAD + N_PAD * N_PAD)
    bytes_accessed = (b_pad * K_FUSED * 2          # x (bf16)
                      + b_pad * N_PAD * 4          # out (f32)
                      + K_FUSED * N_PAD * 2        # W_fused (bf16)
                      + N_PAD * N_PAD * 2          # W_cls (bf16)
                      + 2 * N_PAD * 4)             # biases (f32)

    out = pl.pallas_call(
        langulator_kernel,
        out_shape=jax.ShapeDtypeStruct((b_pad, N_PAD), jnp.float32),
        grid=(n_tiles,),
        in_specs=[
            pl.BlockSpec((tb, K_FUSED), lambda i: (i, 0)),     # x tile
            pl.BlockSpec((K_FUSED, N_PAD), lambda i: (0, 0)),  # W_fused (resident)
            pl.BlockSpec((1, N_PAD), lambda i: (0, 0)),        # b_fused (resident)
            pl.BlockSpec((N_PAD, N_PAD), lambda i: (0, 0)),    # W_cls  (resident)
            pl.BlockSpec((1, N_PAD), lambda i: (0, 0)),        # b_cls  (resident)
        ],
        out_specs=pl.BlockSpec((tb, N_PAD), lambda i: (i, 0)),
        compiler_params=pltpu.CompilerParams(
            dimension_semantics=("parallel",),   # dual-TC sharding on v7x
            vmem_limit_bytes=32 << 20),
        cost_estimate=pl.CostEstimate(
            flops=flops, transcendentals=0, bytes_accessed=bytes_accessed),
    )(x_flat, w1, b1, w2, b2)

    return out[:B, :LANGS]


# ---------------------------------------------------------------------------
# Parameter init (nn.Linear-style), weights stored as (in_features, out_features).
# ---------------------------------------------------------------------------
def init_params(key):
    ks = jax.random.split(key, 6)

    def linear(kw, kb, fan_in, fan_out):
        bound = 1.0 / jnp.sqrt(jnp.float32(fan_in))
        w = jax.random.uniform(kw, (fan_in, fan_out), jnp.float32, -bound, bound)
        b = jax.random.uniform(kb, (fan_out,), jnp.float32, -bound, bound)
        return w, b

    w_emb, b_emb = linear(ks[0], ks[1], TOTAL_CHARS, EMB_SIZE)
    w_mid, b_mid = linear(ks[2], ks[3], CONTEXT * EMB_SIZE, NEURONS)
    w_cls, b_cls = linear(ks[4], ks[5], NEURONS, LANGS)
    return (w_emb, b_emb, w_mid, b_mid, w_cls, b_cls)


# ---------------------------------------------------------------------------
# References.
# ---------------------------------------------------------------------------
def reference_forward(x, params):
    """Unfused f32 forward — matches the PyTorch module exactly."""
    w_emb, b_emb, w_mid, b_mid, w_cls, b_cls = params
    e = jnp.dot(x.reshape(-1, TOTAL_CHARS), w_emb, precision=HIGHEST) + b_emb
    flat = e.reshape(x.shape[0], CONTEXT * EMB_SIZE)
    h = jnp.maximum(jnp.dot(flat, w_mid, precision=HIGHEST) + b_mid, 0.0)
    return jnp.dot(h, w_cls, precision=HIGHEST) + b_cls


def fused_f32_reference(x, params):
    """Fused f32 math — validates the host-side weight fusion."""
    w1, b1, w2, b2 = fuse_and_pad_params(params)
    xf = x.reshape(x.shape[0], K_FUSED)
    h = jnp.maximum(jnp.dot(xf, w1, precision=HIGHEST) + b1, 0.0)
    return (jnp.dot(h, w2, precision=HIGHEST) + b2)[:, :LANGS]


def kernel_consistent_reference(x, params):
    """Mirrors the kernel's bf16-operand / f32-accumulate arithmetic."""
    w1f, b1, w2f, b2 = fuse_and_pad_params(params)
    xf = x.reshape(x.shape[0], K_FUSED).astype(jnp.bfloat16).astype(jnp.float32)
    w1 = w1f.astype(jnp.bfloat16).astype(jnp.float32)
    w2 = w2f.astype(jnp.bfloat16).astype(jnp.float32)
    h = jnp.maximum(jnp.dot(xf, w1, precision=HIGHEST) + b1, 0.0)
    h = h.astype(jnp.bfloat16).astype(jnp.float32)
    return (jnp.dot(h, w2, precision=HIGHEST) + b2)[:, :LANGS]


if __name__ == "__main__":
    key = jax.random.PRNGKey(0)
    k_x, k_p = jax.random.split(key)

    B = 2
    x = jax.random.normal(k_x, (B, CONTEXT, TOTAL_CHARS), dtype=jnp.float32)
    params = init_params(k_p)

    forward = jax.jit(langulator_forward)
    out = jax.block_until_ready(forward(x, params))
    assert out.shape == (B, LANGS), out.shape

    # (1) the host-side weight fusion reproduces the original module (f32).
    ref_exact = reference_forward(x, params)
    ref_fused = fused_f32_reference(x, params)
    assert jnp.allclose(ref_fused, ref_exact, atol=1e-4, rtol=1e-4), \
        "weight fusion mismatch vs unfused reference"

    # (2) the kernel matches the bf16-consistent fused reference.
    ref_kernel = kernel_consistent_reference(x, params)
    assert jnp.allclose(out, ref_kernel, atol=5e-3, rtol=5e-3), \
        "kernel mismatch vs bf16-consistent reference"

    # (3) end-to-end sanity vs exact f32 module semantics (bf16 tolerance).
    assert jnp.allclose(out, ref_exact, atol=1e-1, rtol=1e-1), \
        "kernel mismatch vs f32 reference"

    print("KERNEL_OK")
</pallas_src>

<mosaic_0001>
module attributes {stable_mosaic.version = 11 : i64} {
  func.func @langulator_kernel(%arg0: i32, %arg1: memref<8x864xbf16, #tpu.memory_space<vmem>>, %arg2: memref<864x128xbf16, #tpu.memory_space<vmem>>, %arg3: memref<1x128xf32, #tpu.memory_space<vmem>>, %arg4: memref<128x128xbf16, #tpu.memory_space<vmem>>, %arg5: memref<1x128xf32, #tpu.memory_space<vmem>>, %arg6: memref<8x128xf32, #tpu.memory_space<vmem>>) attributes {dimension_semantics = [#tpu.dimension_semantics<parallel>], iteration_bounds = array<i64: 1>, scalar_prefetch = 0 : i64, scratch_operands = 0 : i64, tpu.core_type = #tpu.core_type<tc>, window_params = [{transform_indices = @transform_0, window_bounds = array<i64: 8, 864>}, {pipeline_mode = #tpu.pipeline_mode<synchronous>, transform_indices = @transform_1, window_bounds = array<i64: 864, 128>}, {pipeline_mode = #tpu.pipeline_mode<synchronous>, transform_indices = @transform_2, window_bounds = array<i64: 1, 128>}, {pipeline_mode = #tpu.pipeline_mode<synchronous>, transform_indices = @transform_3, window_bounds = array<i64: 128, 128>}, {pipeline_mode = #tpu.pipeline_mode<synchronous>, transform_indices = @transform_4, window_bounds = array<i64: 1, 128>}, {transform_indices = @transform_5, window_bounds = array<i64: 8, 128>}]} {
    %c0 = arith.constant 0 : index
    %c0_0 = arith.constant 0 : index
    %0 = vector.load %arg1[%c0, %c0_0] : memref<8x864xbf16, #tpu.memory_space<vmem>>, vector<8x864xbf16>
    %c0_1 = arith.constant 0 : index
    %c0_2 = arith.constant 0 : index
    %1 = vector.load %arg2[%c0_1, %c0_2] : memref<864x128xbf16, #tpu.memory_space<vmem>>, vector<864x128xbf16>
    %cst = arith.constant dense<0.000000e+00> : vector<8x128xf32>
    %2 = tpu.matmul %0, %1, %cst {dimension_numbers = #tpu.dot_dimension_numbers<[1], [0], [0], [1], [0, 0, 1, 1], [], []>} : vector<8x864xbf16>, vector<864x128xbf16>, vector<8x128xf32> -> vector<8x128xf32>
    %c0_3 = arith.constant 0 : index
    %c0_4 = arith.constant 0 : index
    %3 = vector.load %arg3[%c0_3, %c0_4] : memref<1x128xf32, #tpu.memory_space<vmem>>, vector<1x128xf32>
    %4 = vector.broadcast %3 : vector<1x128xf32> to vector<8x128xf32>
    %5 = arith.addf %2, %4 : vector<8x128xf32>
    %cst_5 = arith.constant 0.000000e+00 : f32
    %6 = vector.broadcast %cst_5 : f32 to vector<8x128xf32>
    %7 = arith.maximumf %5, %6 : vector<8x128xf32>
    %8 = arith.truncf %7 : vector<8x128xf32> to vector<8x128xbf16>
    %c0_6 = arith.constant 0 : index
    %c0_7 = arith.constant 0 : index
    %9 = vector.load %arg4[%c0_6, %c0_7] : memref<128x128xbf16, #tpu.memory_space<vmem>>, vector<128x128xbf16>
    %cst_8 = arith.constant dense<0.000000e+00> : vector<8x128xf32>
    %10 = tpu.matmul %8, %9, %cst_8 {dimension_numbers = #tpu.dot_dimension_numbers<[1], [0], [0], [1], [0, 0, 1, 1], [], []>} : vector<8x128xbf16>, vector<128x128xbf16>, vector<8x128xf32> -> vector<8x128xf32>
    %c0_9 = arith.constant 0 : index
    %c0_10 = arith.constant 0 : index
    %11 = vector.load %arg5[%c0_9, %c0_10] : memref<1x128xf32, #tpu.memory_space<vmem>>, vector<1x128xf32>
    %12 = vector.broadcast %11 : vector<1x128xf32> to vector<8x128xf32>
    %13 = arith.addf %10, %12 : vector<8x128xf32>
    %c0_11 = arith.constant 0 : index
    %c0_12 = arith.constant 0 : index
    %14 = vector.load %arg6[%c0_11, %c0_12] : memref<8x128xf32, #tpu.memory_space<vmem>>, vector<8x128xf32>
    tpu.vector_store %arg6[%c0_11, %c0_12], %13 {strides = array<i32>} : memref<8x128xf32, #tpu.memory_space<vmem>>, vector<8x128xf32>,
    return
  }
  func.func @transform_0(%arg0: i32) -> (i32, i32) {
    %c0_i32 = arith.constant 0 : i32
    %c0_i32_0 = arith.constant 0 : i32
    return %arg0, %c0_i32 : i32, i32
  }
  func.func @transform_1(%arg0: i32) -> (i32, i32) {
    %c0_i32 = arith.constant 0 : i32
    %c0_i32_0 = arith.constant 0 : i32
    %c0_i32_1 = arith.constant 0 : i32
    return %c0_i32, %c0_i32_0 : i32, i32
  }
  func.func @transform_2(%arg0: i32) -> (i32, i32) {
    %c0_i32 = arith.constant 0 : i32
    %c0_i32_0 = arith.constant 0 : i32
    %c0_i32_1 = arith.constant 0 : i32
    return %c0_i32, %c0_i32_0 : i32, i32
  }
  func.func @transform_3(%arg0: i32) -> (i32, i32) {
    %c0_i32 = arith.constant 0 : i32
    %c0_i32_0 = arith.constant 0 : i32
    %c0_i32_1 = arith.constant 0 : i32
    return %c0_i32, %c0_i32_0 : i32, i32
  }
  func.func @transform_4(%arg0: i32) -> (i32, i32) {
    %c0_i32 = arith.constant 0 : i32
    %c0_i32_0 = arith.constant 0 : i32
    %c0_i32_1 = arith.constant 0 : i32
    return %c0_i32, %c0_i32_0 : i32, i32
  }
  func.func @transform_5(%arg0: i32) -> (i32, i32) {
    %c0_i32 = arith.constant 0 : i32
    %c0_i32_0 = arith.constant 0 : i32
    return %arg0, %c0_i32 : i32, i32
  }
}

</mosaic_0001>

<llo_original>
// kernel: langulator_forward.1
$region0: #{langulator_forward.1}
  #allocation0 [shape = 'u32[]', space=smem, size = 0x4, offset = 0x4, fixed_abs, tag = 'smem constant byte address 0x4 - core index']
  #allocation1 [shape = 'u32[144,128]{1,0:T(1,128)}', space=vmem, size = 0x12000, scoped, tag = 'internal scratch']
  %s0 = inlined_call_operand.vmem [shape: bf16[8,864], index: 0, kind: input, shape index: {}]
  %s1 = inlined_call_operand.vmem [shape: bf16[864,128], index: 1, kind: input, shape index: {}]
  %s2 = inlined_call_operand.vmem [shape: f32[1,128], index: 2, kind: input, shape index: {}]
  %s3 = inlined_call_operand.vmem [shape: bf16[128,128], index: 3, kind: input, shape index: {}]
  %s4 = inlined_call_operand.vmem [shape: f32[1,128], index: 4, kind: input, shape index: {}]
  %s5 = inlined_call_operand.vmem [shape: f32[8,128], index: 5, kind: output, shape index: {}]
  %s6 = sld [smem:[#allocation0]]
  $region30: #{langulator_forward.1} parent=0
    _
  %s8 = ssub.s32 1, %s6
  %s9 = scalar_select 0, %s8, %s6
  // Predicated region
  $region2: #{langulator_forward.1} parent=0 // pred_check
    _
  $region3: #{langulator_forward.1} parent=0 // pred_check_branch
    %11 = sbr.rel (0) target = $region5
  $region4: #{langulator_forward.1} parent=0 // pred_region
    _
  $region5: #{langulator_forward.1} parent=0 // pred_fallthru
    _
  // Predicated region
  $region6: #{langulator_forward.1} parent=0 // pred_check
    _
  $region7: #{langulator_forward.1} parent=0 // pred_check_branch
    %13 = sbr.rel (0) target = $region9
  $region8: #{langulator_forward.1} parent=0 // pred_region
    _
  $region9: #{langulator_forward.1} parent=0 // pred_fallthru
    _
  // Predicated region
  $region10: #{langulator_forward.1} parent=0 // pred_check
    _
  $region11: #{langulator_forward.1} parent=0 // pred_check_branch
    %15 = sbr.rel (0) target = $region13
  $region12: #{langulator_forward.1} parent=0 // pred_region
    _
  $region13: #{langulator_forward.1} parent=0 // pred_fallthru
    _
  // Predicated region
  $region14: #{langulator_forward.1} parent=0 // pred_check
    _
  $region15: #{langulator_forward.1} parent=0 // pred_check_branch
    %17 = sbr.rel (0) target = $region17
  $region16: #{langulator_forward.1} parent=0 // pred_region
    _
  $region17: #{langulator_forward.1} parent=0 // pred_fallthru
    _
  // Predicated region
  $region18: #{langulator_forward.1} parent=0 // pred_check
    _
  $region19: #{langulator_forward.1} parent=0 // pred_check_branch
    %19 = sbr.rel (0) target = $region21
  $region20: #{langulator_forward.1} parent=0 // pred_region
    _
  $region21: #{langulator_forward.1} parent=0 // pred_fallthru
    _
  %v21 = vld [vmem:[%s0] sm:$0xff]
  %v22 = vld [vmem:[%s0 + $0x8] sm:$0xff]
  %v23 = vld [vmem:[%s0 + $0x10] sm:$0xff]
  %v24 = vld [vmem:[%s0 + $0x18] sm:$0xf]
  %v25 = vld [vmem:[%s1] sm:$0xf]
  %v26 = vld [vmem:[%s1 + $0x4] sm:$0xf]
  %v27 = vld [vmem:[%s1 + $0x8] sm:$0xf]
  %v28 = vld [vmem:[%s1 + $0xc] sm:$0xf]
  %v29 = vld [vmem:[%s1 + $0x10] sm:$0xf]
  %v30 = vld [vmem:[%s1 + $0x14] sm:$0xf]
  %v31 = vld [vmem:[%s1 + $0x18] sm:$0xf]
  %v32 = vld [vmem:[%s1 + $0x1c] sm:$0xf]
  %v33 = vld [vmem:[%s1 + $0x20] sm:$0xf]
  %v34 = vld [vmem:[%s1 + $0x24] sm:$0xf]
  %v35 = vld [vmem:[%s1 + $0x28] sm:$0xf]
  %v36 = vld [vmem:[%s1 + $0x2c] sm:$0xf]
  %v37 = vld [vmem:[%s1 + $0x30] sm:$0xf]
  %v38 = vld [vmem:[%s1 + $0x34] sm:$0xf]
  %v39 = vld [vmem:[%s1 + $0x38] sm:$0xf]
  %v40 = vld [vmem:[%s1 + $0x3c] sm:$0xf]
  %v41 = vld [vmem:[%s1 + $0x40] sm:$0xf]
  %v42 = vld [vmem:[%s1 + $0x44] sm:$0xf]
  %v43 = vld [vmem:[%s1 + $0x48] sm:$0xf]
  %v44 = vld [vmem:[%s1 + $0x4c] sm:$0xf]
  %v45 = vld [vmem:[%s1 + $0x50] sm:$0xf]
  %v46 = vld [vmem:[%s1 + $0x54] sm:$0xf]
  %v47 = vld [vmem:[%s1 + $0x58] sm:$0xf]
  %v48 = vld [vmem:[%s1 + $0x5c] sm:$0xf]
  %v49 = vld [vmem:[%s1 + $0x60] sm:$0xf]
  %v50 = vld [vmem:[%s1 + $0x64] sm:$0xf]
  %v51 = vld [vmem:[%s1 + $0x68] sm:$0xf]
  %v52 = vld [vmem:[%s1 + $0x6c] sm:$0xf]
  %v53 = vld [vmem:[%s1 + $0x70] sm:$0xf]
  %v54 = vld [vmem:[%s1 + $0x74] sm:$0xf]
  %v55 = vld [vmem:[%s1 + $0x78] sm:$0xf]
  %v56 = vld [vmem:[%s1 + $0x7c] sm:$0xf]
  %v57 = vld [vmem:[%s1 + $0x80] sm:$0xf]
  %v58 = vld [vmem:[%s1 + $0x84] sm:$0xf]
  %v59 = vld [vmem:[%s1 + $0x88] sm:$0xf]
  %v60 = vld [vmem:[%s1 + $0x8c] sm:$0xf]
  %v61 = vld [vmem:[%s1 + $0x90] sm:$0xf]
  %v62 = vld [vmem:[%s1 + $0x94] sm:$0xf]
  %v63 = vld [vmem:[%s1 + $0x98] sm:$0xf]
  %v64 = vld [vmem:[%s1 + $0x9c] sm:$0xf]
  %v65 = vld [vmem:[%s1 + $0xa0] sm:$0xf]
  %v66 = vld [vmem:[%s1 + $0xa4] sm:$0xf]
  %v67 = vld [vmem:[%s1 + $0xa8] sm:$0xf]
  %v68 = vld [vmem:[%s1 + $0xac] sm:$0xf]
  %v69 = vld [vmem:[%s1 + $0xb0] sm:$0xf]
  %v70 = vld [vmem:[%s1 + $0xb4] sm:$0xf]
  %v71 = vld [vmem:[%s1 + $0xb8] sm:$0xf]
  %v72 = vld [vmem:[%s1 + $0xbc] sm:$0xf]
  %v73 = vld [vmem:[%s1 + $0xc0] sm:$0xf]
  %v74 = vld [vmem:[%s1 + $0xc4] sm:$0xf]
  %v75 = vld [vmem:[%s1 + $0xc8] sm:$0xf]
  %v76 = vld [vmem:[%s1 + $0xcc] sm:$0xf]
  %v77 = vld [vmem:[%s1 + $0xd0] sm:$0xf]
  %v78 = vld [vmem:[%s1 + $0xd4] sm:$0xf]
  %v79 = vld [vmem:[%s1 + $0xd8] sm:$0xf]
  %v80 = vld [vmem:[%s1 + $0xdc] sm:$0xf]
  %v81 = vld [vmem:[%s1 + $0xe0] sm:$0xf]
  %v82 = vld [vmem:[%s1 + $0xe4] sm:$0xf]
  %v83 = vld [vmem:[%s1 + $0xe8] sm:$0xf]
  %v84 = vld [vmem:[%s1 + $0xec] sm:$0xf]
  %v85 = vld [vmem:[%s1 + $0xf0] sm:$0xf]
  %v86 = vld [vmem:[%s1 + $0xf4] sm:$0xf]
  %v87 = vld [vmem:[%s1 + $0xf8] sm:$0xf]
  %v88 = vld [vmem:[%s1 + $0xfc] sm:$0xf]
  %v89 = vld [vmem:[%s1 + $0x100] sm:$0xf]
  %v90 = vld [vmem:[%s1 + $0x104] sm:$0xf]
  %v91 = vld [vmem:[%s1 + $0x108] sm:$0xf]
  %v92 = vld [vmem:[%s1 + $0x10c] sm:$0xf]
  %v93 = vld [vmem:[%s1 + $0x110] sm:$0xf]
  %v94 = vld [vmem:[%s1 + $0x114] sm:$0xf]
  %v95 = vld [vmem:[%s1 + $0x118] sm:$0xf]
  %v96 = vld [vmem:[%s1 + $0x11c] sm:$0xf]
  %v97 = vld [vmem:[%s1 + $0x120] sm:$0xf]
  %v98 = vld [vmem:[%s1 + $0x124] sm:$0xf]
  %v99 = vld [vmem:[%s1 + $0x128] sm:$0xf]
  %v100 = vld [vmem:[%s1 + $0x12c] sm:$0xf]
  %v101 = vld [vmem:[%s1 + $0x130] sm:$0xf]
  %v102 = vld [vmem:[%s1 + $0x134] sm:$0xf]
  %v103 = vld [vmem:[%s1 + $0x138] sm:$0xf]
  %v104 = vld [vmem:[%s1 + $0x13c] sm:$0xf]
  %v105 = vld [vmem:[%s1 + $0x140] sm:$0xf]
  %v106 = vld [vmem:[%s1 + $0x144] sm:$0xf]
  %v107 = vld [vmem:[%s1 + $0x148] sm:$0xf]
  %v108 = vld [vmem:[%s1 + $0x14c] sm:$0xf]
  %v109 = vld [vmem:[%s1 + $0x150] sm:$0xf]
  %v110 = vld [vmem:[%s1 + $0x154] sm:$0xf]
  %v111 = vld [vmem:[%s1 + $0x158] sm:$0xf]
  %v112 = vld [vmem:[%s1 + $0x15c] sm:$0xf]
  %v113 = vld [vmem:[%s1 + $0x160] sm:$0xf]
  %v114 = vld [vmem:[%s1 + $0x164] sm:$0xf]
  %v115 = vld [vmem:[%s1 + $0x168] sm:$0xf]
  %v116 = vld [vmem:[%s1 + $0x16c] sm:$0xf]
  %v117 = vld [vmem:[%s1 + $0x170] sm:$0xf]
  %v118 = vld [vmem:[%s1 + $0x174] sm:$0xf]
  %v119 = vld [vmem:[%s1 + $0x178] sm:$0xf]
  %v120 = vld [vmem:[%s1 + $0x17c] sm:$0xf]
  %v121 = vld [vmem:[%s1 + $0x180] sm:$0xf]
  %v122 = vld [vmem:[%s1 + $0x184] sm:$0xf]
  %v123 = vld [vmem:[%s1 + $0x188] sm:$0xf]
  %v124 = vld [vmem:[%s1 + $0x18c] sm:$0xf]
  %v125 = vld [vmem:[%s1 + $0x190] sm:$0xf]
  %v126 = vld [vmem:[%s1 + $0x194] sm:$0xf]
  %v127 = vld [vmem:[%s1 + $0x198] sm:$0xf]
  %v128 = vld [vmem:[%s1 + $0x19c] sm:$0xf]
  %v129 = vld [vmem:[%s1 + $0x1a0] sm:$0xf]
  %v130 = vld [vmem:[%s1 + $0x1a4] sm:$0xf]
  %v131 = vld [vmem:[%s1 + $0x1a8] sm:$0xf]
  %v132 = vld [vmem:[%s1 + $0x1ac] sm:$0xf]
  %v133 = vld [vmem:[%s2] sm:$0x1]
  %v135 = vlaneseq
  %v136 = vshrl.u32 %v135, 7
  %v137 = vsub.s32 0, %v136
  %v138 = vrot.slane %v133, %v137
  %v144 = vunpack.c.l.b16 %v21
  %v145 = vunpack.c.h.b16 %v21
  %v146 = vunpack.c.l.b16 %v22
  %v147 = vunpack.c.h.b16 %v22
  %v148 = vunpack.c.l.b16 %v23
  %v149 = vunpack.c.h.b16 %v23
  %v150 = vunpack.c.l.b16 %v24
  %v151 = vpack.c.b16 %v144, %v144
  %v152 = vpack.c.b16 %v145, %v145
  %v153 = vpack.c.b16 %v146, %v146
  %v154 = vpack.c.b16 %v147, %v147
  %v155 = vpack.c.b16 %v148, %v148
  %v156 = vpack.c.b16 %v149, %v149
  %v157 = vpack.c.b16 %v150, %v150
  %v272 = vunpack.c.l.b16 %v25
  %v273 = vunpack.c.l.b16 %v26
  %v274 = vunpack.c.l.b16 %v27
  %v275 = vunpack.c.l.b16 %v28
  %v276 = vunpack.c.l.b16 %v29
  %v277 = vunpack.c.l.b16 %v30
  %v278 = vunpack.c.l.b16 %v31
  %v279 = vunpack.c.l.b16 %v32
  %v280 = vunpack.c.l.b16 %v33
  %v281 = vunpack.c.l.b16 %v34
  %v282 = vunpack.c.l.b16 %v35
  %v283 = vunpack.c.l.b16 %v36
  %v284 = vunpack.c.l.b16 %v37
  %v285 = vunpack.c.l.b16 %v38
  %v286 = vunpack.c.l.b16 %v39
  %v287 = vunpack.c.l.b16 %v40
  %v288 = vunpack.c.l.b16 %v41
  %v289 = vunpack.c.l.b16 %v42
  %v290 = vunpack.c.l.b16 %v43
  %v291 = vunpack.c.l.b16 %v44
  %v292 = vunpack.c.l.b16 %v45
  %v293 = vunpack.c.l.b16 %v46
  %v294 = vunpack.c.l.b16 %v47
  %v295 = vunpack.c.l.b16 %v48
  %v296 = vunpack.c.l.b16 %v49
  %v297 = vunpack.c.l.b16 %v50
  %v298 = vunpack.c.l.b16 %v51
  %v299 = vunpack.c.l.b16 %v52
  %v300 = vunpack.c.l.b16 %v53
  %v301 = vunpack.c.l.b16 %v54
  %v302 = vunpack.c.l.b16 %v55
  %v303 = vunpack.c.l.b16 %v56
  %v304 = vunpack.c.l.b16 %v57
  %v305 = vunpack.c.l.b16 %v58
  %v306 = vunpack.c.l.b16 %v59
  %v307 = vunpack.c.l.b16 %v60
  %v308 = vunpack.c.l.b16 %v61
  %v309 = vunpack.c.l.b16 %v62
  %v310 = vunpack.c.l.b16 %v63
  %v311 = vunpack.c.l.b16 %v64
  %v312 = vunpack.c.l.b16 %v65
  %v313 = vunpack.c.l.b16 %v66
  %v314 = vunpack.c.l.b16 %v67
  %v315 = vunpack.c.l.b16 %v68
  %v316 = vunpack.c.l.b16 %v69
  %v317 = vunpack.c.l.b16 %v70
  %v318 = vunpack.c.l.b16 %v71
  %v319 = vunpack.c.l.b16 %v72
  %v320 = vunpack.c.l.b16 %v73
  %v321 = vunpack.c.l.b16 %v74
  %v322 = vunpack.c.l.b16 %v75
  %v323 = vunpack.c.l.b16 %v76
  %v324 = vunpack.c.l.b16 %v77
  %v325 = vunpack.c.l.b16 %v78
  %v326 = vunpack.c.l.b16 %v79
  %v327 = vunpack.c.l.b16 %v80
  %v328 = vunpack.c.l.b16 %v81
  %v329 = vunpack.c.l.b16 %v82
  %v330 = vunpack.c.l.b16 %v83
  %v331 = vunpack.c.l.b16 %v84
  %v332 = vunpack.c.l.b16 %v85
  %v333 = vunpack.c.l.b16 %v86
  %v334 = vunpack.c.l.b16 %v87
  %v335 = vunpack.c.l.b16 %v88
  %v336 = vunpack.c.l.b16 %v89
  %v337 = vunpack.c.l.b16 %v90
  %v338 = vunpack.c.l.b16 %v91
  %v339 = vunpack.c.l.b16 %v92
  %v340 = vunpack.c.l.b16 %v93
  %v341 = vunpack.c.l.b16 %v94
  %v342 = vunpack.c.l.b16 %v95
  %v343 = vunpack.c.l.b16 %v96
  %v344 = vunpack.c.l.b16 %v97
  %v345 = vunpack.c.l.b16 %v98
  %v346 = vunpack.c.l.b16 %v99
  %v347 = vunpack.c.l.b16 %v100
  %v348 = vunpack.c.l.b16 %v101
  %v349 = vunpack.c.l.b16 %v102
  %v350 = vunpack.c.l.b16 %v103
  %v351 = vunpack.c.l.b16 %v104
  %v352 = vunpack.c.l.b16 %v105
  %v353 = vunpack.c.l.b16 %v106
  %v354 = vunpack.c.l.b16 %v107
  %v355 = vunpack.c.l.b16 %v108
  %v356 = vunpack.c.l.b16 %v109
  %v357 = vunpack.c.l.b16 %v110
  %v358 = vunpack.c.l.b16 %v111
  %v359 = vunpack.c.l.b16 %v112
  %v360 = vunpack.c.l.b16 %v113
  %v361 = vunpack.c.l.b16 %v114
  %v362 = vunpack.c.l.b16 %v115
  %v363 = vunpack.c.l.b16 %v116
  %v364 = vunpack.c.l.b16 %v117
  %v365 = vunpack.c.l.b16 %v118
  %v366 = vunpack.c.l.b16 %v119
  %v367 = vunpack.c.l.b16 %v120
  %v368 = vunpack.c.l.b16 %v121
  %v369 = vunpack.c.l.b16 %v122
  %v370 = vunpack.c.l.b16 %v123
  %v371 = vunpack.c.l.b16 %v124
  %v372 = vunpack.c.l.b16 %v125
  %v373 = vunpack.c.l.b16 %v126
  %v374 = vunpack.c.l.b16 %v127
  %v375 = vunpack.c.l.b16 %v128
  %v376 = vunpack.c.l.b16 %v129
  %v377 = vunpack.c.l.b16 %v130
  %v378 = vunpack.c.l.b16 %v131
  %v379 = vunpack.c.l.b16 %v132
  %v380 = vpack.c.b16 %v273, %v272
  %v381 = vpack.c.b16 %v275, %v274
  %v382 = vpack.c.b16 %v277, %v276
  %v383 = vpack.c.b16 %v279, %v278
  %v384 = vpack.c.b16 %v281, %v280
  %v385 = vpack.c.b16 %v283, %v282
  %v386 = vpack.c.b16 %v285, %v284
  %v387 = vpack.c.b16 %v287, %v286
  %v388 = vpack.c.b16 %v289, %v288
  %v389 = vpack.c.b16 %v291, %v290
  %v390 = vpack.c.b16 %v293, %v292
  %v391 = vpack.c.b16 %v295, %v294
  %v392 = vpack.c.b16 %v297, %v296
  %v393 = vpack.c.b16 %v299, %v298
  %v394 = vpack.c.b16 %v301, %v300
  %v395 = vpack.c.b16 %v303, %v302
  %v396 = vpack.c.b16 %v305, %v304
  %v397 = vpack.c.b16 %v307, %v306
  %v398 = vpack.c.b16 %v309, %v308
  %v399 = vpack.c.b16 %v311, %v310
  %v400 = vpack.c.b16 %v313, %v312
  %v401 = vpack.c.b16 %v315, %v314
  %v402 = vpack.c.b16 %v317, %v316
  %v403 = vpack.c.b16 %v319, %v318
  %v404 = vpack.c.b16 %v321, %v320
  %v405 = vpack.c.b16 %v323, %v322
  %v406 = vpack.c.b16 %v325, %v324
  %v407 = vpack.c.b16 %v327, %v326
  %v408 = vpack.c.b16 %v329, %v328
  %v409 = vpack.c.b16 %v331, %v330
  %v410 = vpack.c.b16 %v333, %v332
  %v411 = vpack.c.b16 %v335, %v334
  %v412 = vpack.c.b16 %v337, %v336
  %v413 = vpack.c.b16 %v339, %v338
  %v414 = vpack.c.b16 %v341, %v340
  %v415 = vpack.c.b16 %v343, %v342
  %v416 = vpack.c.b16 %v345, %v344
  %v417 = vpack.c.b16 %v347, %v346
  %v418 = vpack.c.b16 %v349, %v348
  %v419 = vpack.c.b16 %v351, %v350
  %v420 = vpack.c.b16 %v353, %v352
  %v421 = vpack.c.b16 %v355, %v354
  %v422 = vpack.c.b16 %v357, %v356
  %v423 = vpack.c.b16 %v359, %v358
  %v424 = vpack.c.b16 %v361, %v360
  %v425 = vpack.c.b16 %v363, %v362
  %v426 = vpack.c.b16 %v365, %v364
  %v427 = vpack.c.b16 %v367, %v366
  %v428 = vpack.c.b16 %v369, %v368
  %v429 = vpack.c.b16 %v371, %v370
  %v430 = vpack.c.b16 %v373, %v372
  %v431 = vpack.c.b16 %v375, %v374
  %v432 = vpack.c.b16 %v377, %v376
  %v433 = vpack.c.b16 %v379, %v378
  %vm488 = vcmask 785408
  %v490 = vsel %vm488, %v157, 0
  %492 = vmatprep.subr.bf16.mxu0 0
  %493 = vmatpush1.bf16.msra.mxu0 %v380
  %494 = vmatprep.subr.bf16.mxu0 0
  %495 = vmatpush1.bf16.msra.mxu0 %v381
  %496 = vmatprep.subr.bf16.mxu0 0
  %497 = vmatpush1.bf16.msra.mxu0 %v382
  %498 = vmatprep.subr.bf16.mxu0 0
  %499 = vmatpush1.bf16.msra.mxu0 %v383
  %500 = vmatprep.subr.bf16.mxu0 0
  %501 = vmatpush1.bf16.msra.mxu0 %v384
  %502 = vmatprep.subr.bf16.mxu0 0
  %503 = vmatpush1.bf16.msra.mxu0 %v385
  %504 = vmatprep.subr.bf16.mxu0 0
  %505 = vmatpush1.bf16.msra.mxu0 %v386
  %506 = vmatprep.subr.bf16.mxu0 0
  %507 = vmatpush1.bf16.msra.mxu0 %v387
  %508 = vmatprep.subr.bf16.mxu0 0
  %509 = vmatpush1.bf16.msra.mxu0 %v388
  %510 = vmatprep.subr.bf16.mxu0 0
  %511 = vmatpush1.bf16.msra.mxu0 %v389
  %512 = vmatprep.subr.bf16.mxu0 0
  %513 = vmatpush1.bf16.msra.mxu0 %v390
  %514 = vmatprep.subr.bf16.mxu0 0
  %515 = vmatpush1.bf16.msra.mxu0 %v391
  %516 = vmatprep.subr.bf16.mxu0 0
  %517 = vmatpush1.bf16.msra.mxu0 %v392
  %518 = vmatprep.subr.bf16.mxu0 0
  %519 = vmatpush1.bf16.msra.mxu0 %v393
  %520 = vmatprep.subr.bf16.mxu0 0
  %521 = vmatpush1.bf16.msra.mxu0 %v394
  %522 = vmatprep.subr.bf16.mxu0 0
  %523 = vmatpush1.bf16.msra.mxu0 %v395
  %524 = vmatprep.mubr.bf16.mxu0 %v152
  %525 = vmatmul.mubr.bf16.gmra.mrb[0].mxu0 %v151
  %v526 = vpop.f32.mrb[0].mxu0
  %v527 = vadd.f32 %v138, %v526
  %v528 = vpop.f32.mrb[0].mxu0
  %v529 = vpop.f32.mrb[0].mxu0
  %v530 = vpop.f32.mrb[0].mxu0
  %531 = vdwg.mxu0
  %532 = vmatprep.subr.bf16.mxu0 0
  %533 = vmatpush1.bf16.msra.mxu0 %v396
  %534 = vmatprep.subr.bf16.mxu0 0
  %535 = vmatpush1.bf16.msra.mxu0 %v397
  %536 = vmatprep.subr.bf16.mxu0 0
  %537 = vmatpush1.bf16.msra.mxu0 %v398
  %538 = vmatprep.subr.bf16.mxu0 0
  %539 = vmatpush1.bf16.msra.mxu0 %v399
  %540 = vmatprep.subr.bf16.mxu0 0
  %541 = vmatpush1.bf16.msra.mxu0 %v400
  %542 = vmatprep.subr.bf16.mxu0 0
  %543 = vmatpush1.bf16.msra.mxu0 %v401
  %544 = vmatprep.subr.bf16.mxu0 0
  %545 = vmatpush1.bf16.msra.mxu0 %v402
  %546 = vmatprep.subr.bf16.mxu0 0
  %547 = vmatpush1.bf16.msra.mxu0 %v403
  %548 = vmatprep.subr.bf16.mxu0 0
  %549 = vmatpush1.bf16.msra.mxu0 %v404
  %550 = vmatprep.subr.bf16.mxu0 0
  %551 = vmatpush1.bf16.msra.mxu0 %v405
  %552 = vmatprep.subr.bf16.mxu0 0
  %553 = vmatpush1.bf16.msra.mxu0 %v406
  %554 = vmatprep.subr.bf16.mxu0 0
  %555 = vmatpush1.bf16.msra.mxu0 %v407
  %556 = vmatprep.subr.bf16.mxu0 0
  %557 = vmatpush1.bf16.msra.mxu0 %v408
  %558 = vmatprep.subr.bf16.mxu0 0
  %559 = vmatpush1.bf16.msra.mxu0 %v409
  %560 = vmatprep.subr.bf16.mxu0 0
  %561 = vmatpush1.bf16.msra.mxu0 %v410
  %562 = vmatprep.subr.bf16.mxu0 0
  %563 = vmatpush1.bf16.msra.mxu0 %v411
  %564 = vmatprep.mubr.bf16.mxu0 %v154
  %565 = vmatmul.mubr.bf16.gmra.mrb[0].mxu0 %v153
  %v566 = vpop.f32.mrb[0].mxu0
  %v567 = vadd.f32 %v527, %v566
  %v568 = vpop.f32.mrb[0].mxu0
  %v569 = vpop.f32.mrb[0].mxu0
  %v570 = vpop.f32.mrb[0].mxu0
  %571 = vdwg.mxu0
  %572 = vmatprep.subr.bf16.mxu0 0
  %573 = vmatpush1.bf16.msra.mxu0 %v412
  %574 = vmatprep.subr.bf16.mxu0 0
  %575 = vmatpush1.bf16.msra.mxu0 %v413
  %576 = vmatprep.subr.bf16.mxu0 0
  %577 = vmatpush1.bf16.msra.mxu0 %v414
  %578 = vmatprep.subr.bf16.mxu0 0
  %579 = vmatpush1.bf16.msra.mxu0 %v415
  %580 = vmatprep.subr.bf16.mxu0 0
  %581 = vmatpush1.bf16.msra.mxu0 %v416
  %582 = vmatprep.subr.bf16.mxu0 0
  %583 = vmatpush1.bf16.msra.mxu0 %v417
  %584 = vmatprep.subr.bf16.mxu0 0
  %585 = vmatpush1.bf16.msra.mxu0 %v418
  %586 = vmatprep.subr.bf16.mxu0 0
  %587 = vmatpush1.bf16.msra.mxu0 %v419
  %588 = vmatprep.subr.bf16.mxu0 0
  %589 = vmatpush1.bf16.msra.mxu0 %v420
  %590 = vmatprep.subr.bf16.mxu0 0
  %591 = vmatpush1.bf16.msra.mxu0 %v421
  %592 = vmatprep.subr.bf16.mxu0 0
  %593 = vmatpush1.bf16.msra.mxu0 %v422
  %594 = vmatprep.subr.bf16.mxu0 0
  %595 = vmatpush1.bf16.msra.mxu0 %v423
  %596 = vmatprep.subr.bf16.mxu0 0
  %597 = vmatpush1.bf16.msra.mxu0 %v424
  %598 = vmatprep.subr.bf16.mxu0 0
  %599 = vmatpush1.bf16.msra.mxu0 %v425
  %600 = vmatprep.subr.bf16.mxu0 0
  %601 = vmatpush1.bf16.msra.mxu0 %v426
  %602 = vmatprep.subr.bf16.mxu0 0
  %603 = vmatpush1.bf16.msra.mxu0 %v427
  %604 = vmatprep.mubr.bf16.mxu0 %v156
  %605 = vmatmul.mubr.bf16.gmra.mrb[0].mxu0 %v155
  %v606 = vpop.f32.mrb[0].mxu0
  %v607 = vadd.f32 %v567, %v606
  %v608 = vpop.f32.mrb[0].mxu0
  %v609 = vpop.f32.mrb[0].mxu0
  %v610 = vpop.f32.mrb[0].mxu0
  %611 = vdwg.mxu0
  %612 = vmatprep.subr.bf16.mxu0 0
  %613 = vmatpush1.bf16.msra.mxu0 %v428
  %614 = vmatprep.subr.bf16.mxu0 0
  %615 = vmatpush1.bf16.msra.mxu0 %v429
  %616 = vmatprep.subr.bf16.mxu0 0
  %617 = vmatpush1.bf16.msra.mxu0 %v430
  %618 = vmatprep.subr.bf16.mxu0 0
  %619 = vmatpush1.bf16.msra.mxu0 %v431
  %620 = vmatprep.subr.bf16.mxu0 0
  %621 = vmatpush1.bf16.msra.mxu0 %v432
  %622 = vmatprep.subr.bf16.mxu0 0
  %623 = vmatpush1.bf16.msra.mxu0 %v433
  %624 = vmatprep.subr.bf16.mxu0 0
  %625 = vmatpush1.bf16.msra.mxu0 0
  %626 = vmatprep.subr.bf16.mxu0 0
  %627 = vmatpush1.bf16.msra.mxu0 0
  %628 = vmatprep.subr.bf16.mxu0 0
  %629 = vmatpush1.bf16.msra.mxu0 0
  %630 = vmatprep.subr.bf16.mxu0 0
  %631 = vmatpush1.bf16.msra.mxu0 0
  %632 = vmatprep.subr.bf16.mxu0 0
  %633 = vmatpush1.bf16.msra.mxu0 0
  %634 = vmatprep.subr.bf16.mxu0 0
  %635 = vmatpush1.bf16.msra.mxu0 0
  %636 = vmatprep.subr.bf16.mxu0 0
  %637 = vmatpush1.bf16.msra.mxu0 0
  %638 = vmatprep.subr.bf16.mxu0 0
  %639 = vmatpush1.bf16.msra.mxu0 0
  %640 = vmatprep.subr.bf16.mxu0 0
  %641 = vmatpush1.bf16.msra.mxu0 0
  %642 = vmatprep.subr.bf16.mxu0 0
  %643 = vmatpush1.bf16.msra.mxu0 0
  %644 = vmatprep.mubr.bf16.mxu0 0
  %645 = vmatmul.mubr.bf16.gmra.mrb[0].mxu0 %v490
  %v646 = vpop.f32.mrb[0].mxu0
  %v647 = vadd.f32 %v607, %v646
  %v648 = vpop.f32.mrb[0].mxu0
  %v649 = vpop.f32.mrb[0].mxu0
  %v650 = vpop.f32.mrb[0].mxu0
  %651 = vdwg.mxu0
  %v652 = vmax.f32 %v647, 0.0
  %v653 = vpack.c.bf16 %v652, %v652
  %v654 = vld [vmem:[%s3] sm:$0xf]
  %v655 = vld [vmem:[%s3 + $0x4] sm:$0xf]
  %v656 = vld [vmem:[%s3 + $0x8] sm:$0xf]
  %v657 = vld [vmem:[%s3 + $0xc] sm:$0xf]
  %v658 = vld [vmem:[%s3 + $0x10] sm:$0xf]
  %v659 = vld [vmem:[%s3 + $0x14] sm:$0xf]
  %v660 = vld [vmem:[%s3 + $0x18] sm:$0xf]
  %v661 = vld [vmem:[%s3 + $0x1c] sm:$0xf]
  %v662 = vld [vmem:[%s3 + $0x20] sm:$0xf]
  %v663 = vld [vmem:[%s3 + $0x24] sm:$0xf]
  %v664 = vld [vmem:[%s3 + $0x28] sm:$0xf]
  %v665 = vld [vmem:[%s3 + $0x2c] sm:$0xf]
  %v666 = vld [vmem:[%s3 + $0x30] sm:$0xf]
  %v667 = vld [vmem:[%s3 + $0x34] sm:$0xf]
  %v668 = vld [vmem:[%s3 + $0x38] sm:$0xf]
  %v669 = vld [vmem:[%s3 + $0x3c] sm:$0xf]
  %v670 = vld [vmem:[%s4] sm:$0x1]
  %v672 = vlaneseq
  %v673 = vshrl.u32 %v672, 7
  %v674 = vsub.s32 0, %v673
  %v675 = vrot.slane %v670, %v674
  %v693 = vunpack.c.l.b16 %v654
  %v694 = vunpack.c.l.b16 %v655
  %v695 = vunpack.c.l.b16 %v656
  %v696 = vunpack.c.l.b16 %v657
  %v697 = vunpack.c.l.b16 %v658
  %v698 = vunpack.c.l.b16 %v659
  %v699 = vunpack.c.l.b16 %v660
  %v700 = vunpack.c.l.b16 %v661
  %v701 = vunpack.c.l.b16 %v662
  %v702 = vunpack.c.l.b16 %v663
  %v703 = vunpack.c.l.b16 %v664
  %v704 = vunpack.c.l.b16 %v665
  %v705 = vunpack.c.l.b16 %v666
  %v706 = vunpack.c.l.b16 %v667
  %v707 = vunpack.c.l.b16 %v668
  %v708 = vunpack.c.l.b16 %v669
  %v709 = vpack.c.b16 %v694, %v693
  %v710 = vpack.c.b16 %v696, %v695
  %v711 = vpack.c.b16 %v698, %v697
  %v712 = vpack.c.b16 %v700, %v699
  %v713 = vpack.c.b16 %v702, %v701
  %v714 = vpack.c.b16 %v704, %v703
  %v715 = vpack.c.b16 %v706, %v705
  %v716 = vpack.c.b16 %v708, %v707
  %725 = vmatprep.subr.bf16.mxu0 0
  %726 = vmatpush1.bf16.msra.mxu0 %v709
  %727 = vmatprep.subr.bf16.mxu0 0
  %728 = vmatpush1.bf16.msra.mxu0 %v710
  %729 = vmatprep.subr.bf16.mxu0 0
  %730 = vmatpush1.bf16.msra.mxu0 %v711
  %731 = vmatprep.subr.bf16.mxu0 0
  %732 = vmatpush1.bf16.msra.mxu0 %v712
  %733 = vmatprep.subr.bf16.mxu0 0
  %734 = vmatpush1.bf16.msra.mxu0 %v713
  %735 = vmatprep.subr.bf16.mxu0 0
  %736 = vmatpush1.bf16.msra.mxu0 %v714
  %737 = vmatprep.subr.bf16.mxu0 0
  %738 = vmatpush1.bf16.msra.mxu0 %v715
  %739 = vmatprep.subr.bf16.mxu0 0
  %740 = vmatpush1.bf16.msra.mxu0 %v716
  %741 = vmatprep.subr.bf16.mxu0 0
  %742 = vmatpush1.bf16.msra.mxu0 0
  %743 = vmatprep.subr.bf16.mxu0 0
  %744 = vmatpush1.bf16.msra.mxu0 0
  %745 = vmatprep.subr.bf16.mxu0 0
  %746 = vmatpush1.bf16.msra.mxu0 0
  %747 = vmatprep.subr.bf16.mxu0 0
  %748 = vmatpush1.bf16.msra.mxu0 0
  %749 = vmatprep.subr.bf16.mxu0 0
  %750 = vmatpush1.bf16.msra.mxu0 0
  %751 = vmatprep.subr.bf16.mxu0 0
  %752 = vmatpush1.bf16.msra.mxu0 0
  %753 = vmatprep.subr.bf16.mxu0 0
  %754 = vmatpush1.bf16.msra.mxu0 0
  %755 = vmatprep.subr.bf16.mxu0 0
  %756 = vmatpush1.bf16.msra.mxu0 0
  %757 = vmatprep.mubr.bf16.mxu0 0
  %758 = vmatmul.mubr.bf16.gmra.mrb[0].mxu0 %v653
  %v759 = vpop.f32.mrb[0].mxu0
  %v760 = vadd.f32 %v675, %v759
  %v761 = vpop.f32.mrb[0].mxu0
  %v762 = vpop.f32.mrb[0].mxu0
  %v763 = vpop.f32.mrb[0].mxu0
  %764 = vdwg.mxu0
  %765 = vst [vmem:[%s5] sm:$0xff] %v760
  // Predicated region
  $region22: #{langulator_forward.1} parent=0 // pred_check
    _
  $region23: #{langulator_forward.1} parent=0 // pred_check_branch
    %767 = sbr.rel (0) target = $region25
  $region24: #{langulator_forward.1} parent=0 // pred_region
    _
  $region25: #{langulator_forward.1} parent=0 // pred_fallthru
    _
  // Predicated region
  $region26: #{langulator_forward.1} parent=0 // pred_check
    _
  $region27: #{langulator_forward.1} parent=0 // pred_check_branch
    %769 = sbr.rel (0) target = $region29
  $region28: #{langulator_forward.1} parent=0 // pred_region
    _
  $region29: #{langulator_forward.1} parent=0 // pred_fallthru
    _

</llo_original>
